<compile_context>
chip_gen: v6e
topology: v6e:2x2x1
jax: 0.10.0
libtpu: 0.0.40
codegen_flags: <defaults>
</compile_context>

<pallas_src>
import functools

import jax
import jax.numpy as jnp
from jax.experimental import pallas as pl
from jax.experimental.pallas import tpu as pltpu

BN_EPS = 1e-5
LANE = 128


def _round_up(x, m):
    return ((x + m - 1) // m) * m


def _pad2(a, shape):
    return jnp.pad(a, [(0, t - s) for s, t in zip(a.shape, shape)])


def _const_index_map(ndim):
    return lambda g: (0,) * ndim


def _batchnorm(h, gamma, beta):
    # training-mode BatchNorm1d over axis 0, biased variance, two-pass/centered
    inv_n = 1.0 / h.shape[0]
    mean = jnp.sum(h, axis=0, keepdims=True) * inv_n
    d = h - mean
    var = jnp.sum(d * d, axis=0, keepdims=True) * inv_n
    return d * (jax.lax.rsqrt(var + BN_EPS) * gamma) + beta


def team_encoder_kernel(no_layers, has_emb, team_count_p, compute_dtype, *refs):
    """Fused MLP hot path for one group.  All operands are VMEM blocks.

    refs layout (per grid step / group):
      [team (B,1) i32]                       (only if has_emb)
      data (B,Fp)  (compute_dtype),
      w0   (Fp[+Tp], Hp)  (compute_dtype; rows Fp: = precomputed emb @ w0_emb),
      [w_hidden (L-1,Hp,Hp)]                 (only if no_layers > 1)
      bias (L,Hp) f32, gamma (L,Hp) f32, beta (L,Hp) f32,
      out (B,Hp) f32
    """
    idx = 0
    if has_emb:
        team_ref = refs[0]
        idx = 1
    data_ref, w0_ref = refs[idx], refs[idx + 1]
    idx += 2
    if no_layers > 1:
        wh_ref = refs[idx]
        idx += 1
    b_ref, g_ref, bt_ref, out_ref = (
        refs[idx], refs[idx + 1], refs[idx + 2], refs[idx + 3])

    batch = data_ref.shape[0]

    # first Linear.  Embedding gather is folded in as a one-hot block of the
    # LHS against the precomputed (Tp, Hp) emb@w0_emb rows of w0 -> a single
    # K = Fp + Tp MXU pass (mathematically identical to concat([data, emb]) @ w0).
    x = data_ref[...]                                          # (B, Fp) compute_dtype
    if has_emb:
        tid = team_ref[...]                                    # (B, 1) int32
        lanes = jax.lax.broadcasted_iota(jnp.int32, (batch, team_count_p), 1)
        onehot = (tid == lanes).astype(compute_dtype)          # (B, Tp)
        x = jnp.concatenate([x, onehot], axis=-1)              # (B, Fp+Tp)
    acc = jnp.dot(x, w0_ref[...], preferred_element_type=jnp.float32)
    h = jnp.maximum(acc + b_ref[0:1, :], 0.0)

    # hidden blocks: BN -> Linear -> ReLU   (static unroll; L is small)
    # TODO(synk): if no_layers grows, move this to a layer grid axis instead.
    for i in range(no_layers - 1):
        hn = _batchnorm(h, g_ref[i:i + 1, :], bt_ref[i:i + 1, :])
        acc = jnp.dot(hn.astype(compute_dtype), wh_ref[i],
                      preferred_element_type=jnp.float32)
        h = jnp.maximum(acc + b_ref[i + 1:i + 2, :], 0.0)

    # final BN
    out_ref[...] = _batchnorm(
        h, g_ref[no_layers - 1:no_layers, :], bt_ref[no_layers - 1:no_layers, :])


def init_params(key, team_count, feature_cols, embedding_dim, hidden_dim, no_layers):
    """Deterministic synthetic parameters (shapes match the PyTorch module)."""
    emb_dim = embedding_dim or 0
    d_in = emb_dim + feature_cols
    params = {}
    keys = jax.random.split(key, 4 * no_layers + 2)
    k = 0
    if emb_dim:
        params["embedding"] = jax.random.normal(
            keys[k], (team_count, emb_dim), dtype=jnp.float32)
    k += 1
    lim0 = 1.0 / float(d_in) ** 0.5
    params["w0"] = jax.random.uniform(
        keys[k], (d_in, hidden_dim), minval=-lim0, maxval=lim0, dtype=jnp.float32)
    k += 1
    params["b0"] = jax.random.uniform(
        keys[k], (hidden_dim,), minval=-lim0, maxval=lim0, dtype=jnp.float32)
    k += 1
    limh = 1.0 / float(hidden_dim) ** 0.5
    for i in range(no_layers - 1):
        params[f"gamma{i}"] = 1.0 + 0.1 * jax.random.normal(
            keys[k], (hidden_dim,), dtype=jnp.float32); k += 1
        params[f"beta{i}"] = 0.1 * jax.random.normal(
            keys[k], (hidden_dim,), dtype=jnp.float32); k += 1
        params[f"w{i + 1}"] = jax.random.uniform(
            keys[k], (hidden_dim, hidden_dim), minval=-limh, maxval=limh,
            dtype=jnp.float32); k += 1
        params[f"b{i + 1}"] = jax.random.uniform(
            keys[k], (hidden_dim,), minval=-limh, maxval=limh,
            dtype=jnp.float32); k += 1
    params["gamma_f"] = 1.0 + 0.1 * jax.random.normal(
        keys[k], (hidden_dim,), dtype=jnp.float32); k += 1
    params["beta_f"] = 0.1 * jax.random.normal(
        keys[k], (hidden_dim,), dtype=jnp.float32)
    return params


def pack_params(params, *, team_count, feature_cols, embedding_dim, hidden_dim,
                no_layers, compute_dtype=jnp.float32):
    """Zero-pad to lane-dense (multiples of 128) shapes, stack per-layer params,
    and fold the input-independent emb @ w0_emb into the first-layer weight."""
    emb_dim = embedding_dim or 0
    Hp = _round_up(hidden_dim, LANE)
    Fp = _round_up(feature_cols, LANE)
    packed = {"Hp": Hp, "Fp": Fp, "Tp": 0}

    w0 = params["w0"]                                          # (d_in, hidden)
    w0_data = _pad2(w0[:feature_cols], (Fp, Hp))
    if emb_dim:
        Tp = _round_up(team_count, LANE)
        packed["Tp"] = Tp
        # concat([data, emb[team]]) @ w0
        #   == concat([data, onehot(team)]) @ [[w0_data], [emb @ w0_emb]]
        # Precompute emb @ w0_emb once here, in f32, cast once below.
        emb_w = params["embedding"] @ w0[feature_cols:]        # (team_count, hidden)
        w0_full = jnp.concatenate([w0_data, _pad2(emb_w, (Tp, Hp))], axis=0)
    else:
        w0_full = w0_data
    packed["w0"] = w0_full.astype(compute_dtype)

    if no_layers > 1:
        wh = jnp.stack([params[f"w{i + 1}"] for i in range(no_layers - 1)], axis=0)
        packed["w_hidden"] = jnp.pad(
            wh, ((0, 0), (0, Hp - hidden_dim), (0, Hp - hidden_dim))
        ).astype(compute_dtype)

    col_pad = ((0, 0), (0, Hp - hidden_dim))
    b = jnp.stack([params[f"b{i}"] for i in range(no_layers)], axis=0)
    g = jnp.stack([params[f"gamma{i}"] for i in range(no_layers - 1)]
                  + [params["gamma_f"]], axis=0)
    bt = jnp.stack([params[f"beta{i}"] for i in range(no_layers - 1)]
                   + [params["beta_f"]], axis=0)
    packed["b"] = jnp.pad(b, col_pad).astype(jnp.float32)
    packed["gamma"] = jnp.pad(g, col_pad).astype(jnp.float32)
    packed["beta"] = jnp.pad(bt, col_pad).astype(jnp.float32)
    return packed


def team_encoder_forward(data, team, packed, *, feature_cols, embedding_dim,
                         hidden_dim, no_layers, compute_dtype=jnp.float32,
                         slice_output=True):
    """Forward pass.  `data` may be (B, F) or (G, B, F) for G independent
    encoder passes fused into one pallas_call (grid over G, "parallel" so the
    two v7x TensorCores each take groups; BN stats stay per-group)."""
    emb_dim = embedding_dim or 0
    has_emb = bool(emb_dim)
    Hp, Fp, Tp = packed["Hp"], packed["Fp"], packed["Tp"]

    data = jnp.asarray(data)
    squeeze_group = data.ndim == 2
    if squeeze_group:
        data = data[None]
        if has_emb:
            team = jnp.asarray(team)[None]
    G, B = data.shape[0], data.shape[1]

    # Cast to the MXU operand dtype here (halves data DMA in the bf16 path,
    # no cast in the kernel) and pad to a lane-dense (B, Fp) slab.  Callers
    # may pass pre-padded data (last dim == Fp) to skip the pad round trip.
    data_p = data.astype(compute_dtype)
    if data_p.shape[-1] != Fp:
        data_p = jnp.pad(data_p, ((0, 0), (0, 0), (0, Fp - data_p.shape[-1])))

    inputs, in_specs = [], []
    if has_emb:
        inputs.append(jnp.asarray(team).astype(jnp.int32).reshape(G, B, 1))
        in_specs.append(pl.BlockSpec((pl.Squeezed(), B, 1), lambda g: (g, 0, 0)))
    inputs.append(data_p)
    in_specs.append(pl.BlockSpec((pl.Squeezed(), B, Fp), lambda g: (g, 0, 0)))

    weight_names = ["w0"] + (["w_hidden"] if no_layers > 1 else []) \
        + ["b", "gamma", "beta"]
    for name in weight_names:
        w = packed[name]
        inputs.append(w)
        in_specs.append(pl.BlockSpec(w.shape, _const_index_map(w.ndim)))

    out_specs = pl.BlockSpec((pl.Squeezed(), B, Hp), lambda g: (g, 0, 0))

    # cost / VMEM sizing
    weight_bytes = sum(int(packed[n].size) * packed[n].dtype.itemsize
                       for n in weight_names)
    io_step_bytes = (B * Fp * data_p.dtype.itemsize + B * Hp * 4
                     + (B * 4 if has_emb else 0))
    bytes_accessed = weight_bytes + G * io_step_bytes
    k_in = packed["w0"].shape[0]
    flops = G * (2 * B * k_in * Hp + (no_layers - 1) * 2 * B * Hp * Hp)
    transcendentals = G * no_layers * Hp                       # rsqrt per BN column

    try:  # per-generation VMEM (64 MiB/TC on v7x, 128 MiB on v5e/v6e)
        vmem_cap = int(getattr(pltpu.get_tpu_info(), "vmem_capacity_bytes",
                               128 << 20))
    except Exception:
        vmem_cap = 128 << 20
    vmem_limit = int(min(max(2 * weight_bytes + 4 * io_step_bytes, 16 << 20),
                         (vmem_cap * 3) // 4))

    kernel = functools.partial(
        team_encoder_kernel, no_layers, has_emb, Tp, compute_dtype)

    out_p = pl.pallas_call(
        kernel,
        grid=(G,),
        out_shape=jax.ShapeDtypeStruct((G, B, Hp), jnp.float32),
        in_specs=in_specs,
        out_specs=out_specs,
        compiler_params=pltpu.CompilerParams(
            dimension_semantics=("parallel",),
            vmem_limit_bytes=vmem_limit),
        cost_estimate=pl.CostEstimate(
            flops=int(flops),
            transcendentals=int(transcendentals),
            bytes_accessed=int(bytes_accessed)),
    )(*inputs)

    out = out_p[..., :hidden_dim] if slice_output else out_p
    if squeeze_group:
        out = out[0]
    return out


def team_encoder_reference(data, team, params, *, embedding_dim, no_layers):
    """Pure-JAX reference (training-mode BN, f32)."""
    if embedding_dim:
        x = jnp.concatenate([data, params["embedding"][team]], axis=-1)
    else:
        x = data
    h = jnp.maximum(x @ params["w0"] + params["b0"][None, :], 0.0)
    for i in range(no_layers - 1):
        mean = h.mean(0, keepdims=True)
        var = ((h - mean) ** 2).mean(0, keepdims=True)
        hn = ((h - mean) / jnp.sqrt(var + BN_EPS)
              * params[f"gamma{i}"][None, :] + params[f"beta{i}"][None, :])
        h = jnp.maximum(hn @ params[f"w{i + 1}"] + params[f"b{i + 1}"][None, :], 0.0)
    mean = h.mean(0, keepdims=True)
    var = ((h - mean) ** 2).mean(0, keepdims=True)
    return ((h - mean) / jnp.sqrt(var + BN_EPS)
            * params["gamma_f"][None, :] + params["beta_f"][None, :])


if __name__ == "__main__":
    team_count, feature_cols = 30, 12
    embedding_dim, hidden_dim, no_layers, batch = 4, 32, 3, 16

    key = jax.random.PRNGKey(0)
    k_data, k_team, k_params, k_data2, k_team2 = jax.random.split(key, 5)
    data = jax.random.normal(k_data, (batch, feature_cols), dtype=jnp.float32)
    team = jax.random.randint(k_team, (batch,), 0, team_count, dtype=jnp.int32)
    params = init_params(k_params, team_count, feature_cols, embedding_dim,
                         hidden_dim, no_layers)
    ref = team_encoder_reference(data, team, params,
                                 embedding_dim=embedding_dim, no_layers=no_layers)

    common = dict(team_count=team_count, feature_cols=feature_cols,
                  embedding_dim=embedding_dim, hidden_dim=hidden_dim,
                  no_layers=no_layers)
    fwd_kw = dict(feature_cols=feature_cols, embedding_dim=embedding_dim,
                  hidden_dim=hidden_dim, no_layers=no_layers)

    # 1) f32 MXU operand path
    packed_f32 = pack_params(params, compute_dtype=jnp.float32, **common)
    out_f32 = jax.block_until_ready(team_encoder_forward(
        data, team, packed_f32, compute_dtype=jnp.float32, **fwd_kw))
    assert out_f32.shape == (batch, hidden_dim), out_f32.shape
    assert jnp.allclose(out_f32, ref, atol=1e-3, rtol=1e-3), "f32 mismatch vs reference"

    # 2) bf16-operand path (f32 accumulation) -- recommended on v5e/v6e/v7x
    packed_bf16 = pack_params(params, compute_dtype=jnp.bfloat16, **common)
    out_bf16 = jax.block_until_ready(team_encoder_forward(
        data, team, packed_bf16, compute_dtype=jnp.bfloat16, **fwd_kw))
    assert jnp.allclose(out_bf16, ref, atol=1e-1, rtol=1e-1), "bf16 path diverged"

    # 3) fused home/away: two independent encoder passes in one pallas_call,
    #    grid=(2,) "parallel" (shards across both v7x TensorCores)
    data2 = jax.random.normal(k_data2, (batch, feature_cols), dtype=jnp.float32)
    team2 = jax.random.randint(k_team2, (batch,), 0, team_count, dtype=jnp.int32)
    out_pair = jax.block_until_ready(team_encoder_forward(
        jnp.stack([data, data2]), jnp.stack([team, team2]), packed_f32,
        compute_dtype=jnp.float32, **fwd_kw))
    ref2 = team_encoder_reference(data2, team2, params,
                                  embedding_dim=embedding_dim, no_layers=no_layers)
    assert out_pair.shape == (2, batch, hidden_dim), out_pair.shape
    assert jnp.allclose(out_pair[0], ref, atol=1e-3, rtol=1e-3), "fused group 0 mismatch"
    assert jnp.allclose(out_pair[1], ref2, atol=1e-3, rtol=1e-3), "fused group 1 mismatch"

    # 4) no-embedding variant (embedding_dim=None in the PyTorch module)
    params_ne = init_params(k_params, team_count, feature_cols, 0, hidden_dim, 2)
    packed_ne = pack_params(params_ne, team_count=team_count,
                            feature_cols=feature_cols, embedding_dim=0,
                            hidden_dim=hidden_dim, no_layers=2)
    out_ne = jax.block_until_ready(team_encoder_forward(
        data, team, packed_ne, feature_cols=feature_cols, embedding_dim=0,
        hidden_dim=hidden_dim, no_layers=2))
    ref_ne = team_encoder_reference(data, team, params_ne,
                                    embedding_dim=0, no_layers=2)
    assert jnp.allclose(out_ne, ref_ne, atol=1e-3, rtol=1e-3), "no-emb mismatch"

    print("KERNEL_OK")
</pallas_src>

<mosaic_0001>
module attributes {stable_mosaic.version = 11 : i64} {
  func.func @team_encoder_kernel(%arg0: i32, %arg1: memref<1x16x1xi32, #tpu.memory_space<vmem>>, %arg2: memref<1x16x128xf32, #tpu.memory_space<vmem>>, %arg3: memref<256x128xf32, #tpu.memory_space<vmem>>, %arg4: memref<2x128x128xf32, #tpu.memory_space<vmem>>, %arg5: memref<3x128xf32, #tpu.memory_space<vmem>>, %arg6: memref<3x128xf32, #tpu.memory_space<vmem>>, %arg7: memref<3x128xf32, #tpu.memory_space<vmem>>, %arg8: memref<1x16x128xf32, #tpu.memory_space<vmem>>) attributes {dimension_semantics = [#tpu.dimension_semantics<parallel>], iteration_bounds = array<i64: 1>, scalar_prefetch = 0 : i64, scratch_operands = 0 : i64, tpu.core_type = #tpu.core_type<tc>, window_params = [{transform_indices = @transform_0, window_bounds = array<i64: 1, 16, 1>}, {transform_indices = @transform_1, window_bounds = array<i64: 1, 16, 128>}, {pipeline_mode = #tpu.pipeline_mode<synchronous>, transform_indices = @transform_2, window_bounds = array<i64: 256, 128>}, {pipeline_mode = #tpu.pipeline_mode<synchronous>, transform_indices = @transform_3, window_bounds = array<i64: 2, 128, 128>}, {pipeline_mode = #tpu.pipeline_mode<synchronous>, transform_indices = @transform_4, window_bounds = array<i64: 3, 128>}, {pipeline_mode = #tpu.pipeline_mode<synchronous>, transform_indices = @transform_5, window_bounds = array<i64: 3, 128>}, {pipeline_mode = #tpu.pipeline_mode<synchronous>, transform_indices = @transform_6, window_bounds = array<i64: 3, 128>}, {transform_indices = @transform_7, window_bounds = array<i64: 1, 16, 128>}]} {
    %c0 = arith.constant 0 : index
    %c0_0 = arith.constant 0 : index
    %c0_1 = arith.constant 0 : index
    %0 = vector.load %arg2[%c0, %c0_0, %c0_1] : memref<1x16x128xf32, #tpu.memory_space<vmem>>, vector<1x16x128xf32>
    %1 = vector.shape_cast %0 : vector<1x16x128xf32> to vector<16x128xf32>
    %c0_2 = arith.constant 0 : index
    %c0_3 = arith.constant 0 : index
    %c0_4 = arith.constant 0 : index
    %2 = vector.load %arg1[%c0_2, %c0_3, %c0_4] : memref<1x16x1xi32, #tpu.memory_space<vmem>>, vector<1x16x1xi32>
    %3 = vector.shape_cast %2 : vector<1x16x1xi32> to vector<16x1xi32>
    %4 = tpu.iota {dimensions = array<i32: 1>} : vector<16x128xi32>
    %5 = vector.broadcast %3 : vector<16x1xi32> to vector<16x128xi32>
    %6 = arith.cmpi eq, %5, %4 : vector<16x128xi32>
    %7 = arith.extui %6 : vector<16x128xi1> to vector<16x128xi32>
    %8 = arith.sitofp %7 : vector<16x128xi32> to vector<16x128xf32>
    %9 = tpu.concatenate %1, %8 in 1 : vector<16x128xf32>, vector<16x128xf32> -> vector<16x256xf32>
    %c0_5 = arith.constant 0 : index
    %c0_6 = arith.constant 0 : index
    %10 = vector.load %arg3[%c0_5, %c0_6] : memref<256x128xf32, #tpu.memory_space<vmem>>, vector<256x128xf32>
    %cst = arith.constant dense<0.000000e+00> : vector<16x128xf32>
    %11 = tpu.matmul %9, %10, %cst {dimension_numbers = #tpu.dot_dimension_numbers<[1], [0], [0], [1], [0, 0, 1, 1], [], []>} : vector<16x256xf32>, vector<256x128xf32>, vector<16x128xf32> -> vector<16x128xf32>
    %c0_7 = arith.constant 0 : index
    %c0_8 = arith.constant 0 : index
    %12 = vector.load %arg5[%c0_7, %c0_8] : memref<3x128xf32, #tpu.memory_space<vmem>>, vector<1x128xf32>
    %13 = vector.broadcast %12 : vector<1x128xf32> to vector<16x128xf32>
    %14 = arith.addf %11, %13 : vector<16x128xf32>
    %cst_9 = arith.constant 0.000000e+00 : f32
    %15 = vector.broadcast %cst_9 : f32 to vector<16x128xf32>
    %16 = arith.maximumf %14, %15 : vector<16x128xf32>
    %c0_10 = arith.constant 0 : index
    %c0_11 = arith.constant 0 : index
    %17 = vector.load %arg6[%c0_10, %c0_11] : memref<3x128xf32, #tpu.memory_space<vmem>>, vector<1x128xf32>
    %c0_12 = arith.constant 0 : index
    %c0_13 = arith.constant 0 : index
    %18 = vector.load %arg7[%c0_12, %c0_13] : memref<3x128xf32, #tpu.memory_space<vmem>>, vector<1x128xf32>
    %cst_14 = arith.constant dense<0.000000e+00> : vector<128xf32>
    %19 = vector.multi_reduction <add>, %16, %cst_14 [0] : vector<16x128xf32> to vector<128xf32>
    %20 = vector.shape_cast %19 : vector<128xf32> to vector<1x128xf32>
    %cst_15 = arith.constant 6.250000e-02 : f32
    %21 = vector.broadcast %cst_15 : f32 to vector<1x128xf32>
    %22 = arith.mulf %20, %21 : vector<1x128xf32>
    %23 = vector.broadcast %22 : vector<1x128xf32> to vector<16x128xf32>
    %24 = arith.subf %16, %23 : vector<16x128xf32>
    %25 = arith.mulf %24, %24 : vector<16x128xf32>
    %cst_16 = arith.constant dense<0.000000e+00> : vector<128xf32>
    %26 = vector.multi_reduction <add>, %25, %cst_16 [0] : vector<16x128xf32> to vector<128xf32>
    %27 = vector.shape_cast %26 : vector<128xf32> to vector<1x128xf32>
    %cst_17 = arith.constant 6.250000e-02 : f32
    %28 = vector.broadcast %cst_17 : f32 to vector<1x128xf32>
    %29 = arith.mulf %27, %28 : vector<1x128xf32>
    %cst_18 = arith.constant 9.99999974E-6 : f32
    %30 = vector.broadcast %cst_18 : f32 to vector<1x128xf32>
    %31 = arith.addf %29, %30 : vector<1x128xf32>
    %32 = math.rsqrt %31 : vector<1x128xf32>
    %33 = arith.mulf %32, %17 : vector<1x128xf32>
    %34 = vector.broadcast %33 : vector<1x128xf32> to vector<16x128xf32>
    %35 = arith.mulf %24, %34 : vector<16x128xf32>
    %36 = vector.broadcast %18 : vector<1x128xf32> to vector<16x128xf32>
    %37 = arith.addf %35, %36 : vector<16x128xf32>
    %c0_19 = arith.constant 0 : index
    %c0_20 = arith.constant 0 : index
    %c0_21 = arith.constant 0 : index
    %38 = vector.load %arg4[%c0_19, %c0_20, %c0_21] : memref<2x128x128xf32, #tpu.memory_space<vmem>>, vector<1x128x128xf32>
    %39 = vector.shape_cast %38 : vector<1x128x128xf32> to vector<128x128xf32>
    %cst_22 = arith.constant dense<0.000000e+00> : vector<16x128xf32>
    %40 = tpu.matmul %37, %39, %cst_22 {dimension_numbers = #tpu.dot_dimension_numbers<[1], [0], [0], [1], [0, 0, 1, 1], [], []>} : vector<16x128xf32>, vector<128x128xf32>, vector<16x128xf32> -> vector<16x128xf32>
    %c1 = arith.constant 1 : index
    %c0_23 = arith.constant 0 : index
    %41 = vector.load %arg5[%c1, %c0_23] : memref<3x128xf32, #tpu.memory_space<vmem>>, vector<1x128xf32>
    %42 = vector.broadcast %41 : vector<1x128xf32> to vector<16x128xf32>
    %43 = arith.addf %40, %42 : vector<16x128xf32>
    %cst_24 = arith.constant 0.000000e+00 : f32
    %44 = vector.broadcast %cst_24 : f32 to vector<16x128xf32>
    %45 = arith.maximumf %43, %44 : vector<16x128xf32>
    %c1_25 = arith.constant 1 : index
    %c0_26 = arith.constant 0 : index
    %46 = vector.load %arg6[%c1_25, %c0_26] : memref<3x128xf32, #tpu.memory_space<vmem>>, vector<1x128xf32>
    %c1_27 = arith.constant 1 : index
    %c0_28 = arith.constant 0 : index
    %47 = vector.load %arg7[%c1_27, %c0_28] : memref<3x128xf32, #tpu.memory_space<vmem>>, vector<1x128xf32>
    %cst_29 = arith.constant dense<0.000000e+00> : vector<128xf32>
    %48 = vector.multi_reduction <add>, %45, %cst_29 [0] : vector<16x128xf32> to vector<128xf32>
    %49 = vector.shape_cast %48 : vector<128xf32> to vector<1x128xf32>
    %cst_30 = arith.constant 6.250000e-02 : f32
    %50 = vector.broadcast %cst_30 : f32 to vector<1x128xf32>
    %51 = arith.mulf %49, %50 : vector<1x128xf32>
    %52 = vector.broadcast %51 : vector<1x128xf32> to vector<16x128xf32>
    %53 = arith.subf %45, %52 : vector<16x128xf32>
    %54 = arith.mulf %53, %53 : vector<16x128xf32>
    %cst_31 = arith.constant dense<0.000000e+00> : vector<128xf32>
    %55 = vector.multi_reduction <add>, %54, %cst_31 [0] : vector<16x128xf32> to vector<128xf32>
    %56 = vector.shape_cast %55 : vector<128xf32> to vector<1x128xf32>
    %cst_32 = arith.constant 6.250000e-02 : f32
    %57 = vector.broadcast %cst_32 : f32 to vector<1x128xf32>
    %58 = arith.mulf %56, %57 : vector<1x128xf32>
    %cst_33 = arith.constant 9.99999974E-6 : f32
    %59 = vector.broadcast %cst_33 : f32 to vector<1x128xf32>
    %60 = arith.addf %58, %59 : vector<1x128xf32>
    %61 = math.rsqrt %60 : vector<1x128xf32>
    %62 = arith.mulf %61, %46 : vector<1x128xf32>
    %63 = vector.broadcast %62 : vector<1x128xf32> to vector<16x128xf32>
    %64 = arith.mulf %53, %63 : vector<16x128xf32>
    %65 = vector.broadcast %47 : vector<1x128xf32> to vector<16x128xf32>
    %66 = arith.addf %64, %65 : vector<16x128xf32>
    %c1_34 = arith.constant 1 : index
    %c0_35 = arith.constant 0 : index
    %c0_36 = arith.constant 0 : index
    %67 = vector.load %arg4[%c1_34, %c0_35, %c0_36] : memref<2x128x128xf32, #tpu.memory_space<vmem>>, vector<1x128x128xf32>
    %68 = vector.shape_cast %67 : vector<1x128x128xf32> to vector<128x128xf32>
    %cst_37 = arith.constant dense<0.000000e+00> : vector<16x128xf32>
    %69 = tpu.matmul %66, %68, %cst_37 {dimension_numbers = #tpu.dot_dimension_numbers<[1], [0], [0], [1], [0, 0, 1, 1], [], []>} : vector<16x128xf32>, vector<128x128xf32>, vector<16x128xf32> -> vector<16x128xf32>
    %c2 = arith.constant 2 : index
    %c0_38 = arith.constant 0 : index
    %70 = vector.load %arg5[%c2, %c0_38] : memref<3x128xf32, #tpu.memory_space<vmem>>, vector<1x128xf32>
    %71 = vector.broadcast %70 : vector<1x128xf32> to vector<16x128xf32>
    %72 = arith.addf %69, %71 : vector<16x128xf32>
    %cst_39 = arith.constant 0.000000e+00 : f32
    %73 = vector.broadcast %cst_39 : f32 to vector<16x128xf32>
    %74 = arith.maximumf %72, %73 : vector<16x128xf32>
    %c2_40 = arith.constant 2 : index
    %c0_41 = arith.constant 0 : index
    %75 = vector.load %arg6[%c2_40, %c0_41] : memref<3x128xf32, #tpu.memory_space<vmem>>, vector<1x128xf32>
    %c2_42 = arith.constant 2 : index
    %c0_43 = arith.constant 0 : index
    %76 = vector.load %arg7[%c2_42, %c0_43] : memref<3x128xf32, #tpu.memory_space<vmem>>, vector<1x128xf32>
    %cst_44 = arith.constant dense<0.000000e+00> : vector<128xf32>
    %77 = vector.multi_reduction <add>, %74, %cst_44 [0] : vector<16x128xf32> to vector<128xf32>
    %78 = vector.shape_cast %77 : vector<128xf32> to vector<1x128xf32>
    %cst_45 = arith.constant 6.250000e-02 : f32
    %79 = vector.broadcast %cst_45 : f32 to vector<1x128xf32>
    %80 = arith.mulf %78, %79 : vector<1x128xf32>
    %81 = vector.broadcast %80 : vector<1x128xf32> to vector<16x128xf32>
    %82 = arith.subf %74, %81 : vector<16x128xf32>
    %83 = arith.mulf %82, %82 : vector<16x128xf32>
    %cst_46 = arith.constant dense<0.000000e+00> : vector<128xf32>
    %84 = vector.multi_reduction <add>, %83, %cst_46 [0] : vector<16x128xf32> to vector<128xf32>
    %85 = vector.shape_cast %84 : vector<128xf32> to vector<1x128xf32>
    %cst_47 = arith.constant 6.250000e-02 : f32
    %86 = vector.broadcast %cst_47 : f32 to vector<1x128xf32>
    %87 = arith.mulf %85, %86 : vector<1x128xf32>
    %cst_48 = arith.constant 9.99999974E-6 : f32
    %88 = vector.broadcast %cst_48 : f32 to vector<1x128xf32>
    %89 = arith.addf %87, %88 : vector<1x128xf32>
    %90 = math.rsqrt %89 : vector<1x128xf32>
    %91 = arith.mulf %90, %75 : vector<1x128xf32>
    %92 = vector.broadcast %91 : vector<1x128xf32> to vector<16x128xf32>
    %93 = arith.mulf %82, %92 : vector<16x128xf32>
    %94 = vector.broadcast %76 : vector<1x128xf32> to vector<16x128xf32>
    %95 = arith.addf %93, %94 : vector<16x128xf32>
    %c0_49 = arith.constant 0 : index
    %c0_50 = arith.constant 0 : index
    %c0_51 = arith.constant 0 : index
    %96 = vector.load %arg8[%c0_49, %c0_50, %c0_51] : memref<1x16x128xf32, #tpu.memory_space<vmem>>, vector<1x16x128xf32>
    %97 = vector.shape_cast %96 : vector<1x16x128xf32> to vector<16x128xf32>
    %98 = vector.shape_cast %95 : vector<16x128xf32> to vector<1x16x128xf32>
    tpu.vector_store %arg8[%c0_49, %c0_50, %c0_51], %98 {strides = array<i32>} : memref<1x16x128xf32, #tpu.memory_space<vmem>>, vector<1x16x128xf32>,
    return
  }
  func.func @transform_0(%arg0: i32) -> (i32, i32, i32) {
    %c0_i32 = arith.constant 0 : i32
    %c0_i32_0 = arith.constant 0 : i32
    %c0_i32_1 = arith.constant 0 : i32
    return %arg0, %c0_i32, %c0_i32_0 : i32, i32, i32
  }
  func.func @transform_1(%arg0: i32) -> (i32, i32, i32) {
    %c0_i32 = arith.constant 0 : i32
    %c0_i32_0 = arith.constant 0 : i32
    %c0_i32_1 = arith.constant 0 : i32
    return %arg0, %c0_i32, %c0_i32_0 : i32, i32, i32
  }
  func.func @transform_2(%arg0: i32) -> (i32, i32) {
    %c0_i32 = arith.constant 0 : i32
    %c0_i32_0 = arith.constant 0 : i32
    %c0_i32_1 = arith.constant 0 : i32
    return %c0_i32, %c0_i32_0 : i32, i32
  }
  func.func @transform_3(%arg0: i32) -> (i32, i32, i32) {
    %c0_i32 = arith.constant 0 : i32
    %c0_i32_0 = arith.constant 0 : i32
    %c0_i32_1 = arith.constant 0 : i32
    %c0_i32_2 = arith.constant 0 : i32
    return %c0_i32, %c0_i32_0, %c0_i32_1 : i32, i32, i32
  }
  func.func @transform_4(%arg0: i32) -> (i32, i32) {
    %c0_i32 = arith.constant 0 : i32
    %c0_i32_0 = arith.constant 0 : i32
    %c0_i32_1 = arith.constant 0 : i32
    return %c0_i32, %c0_i32_0 : i32, i32
  }
  func.func @transform_5(%arg0: i32) -> (i32, i32) {
    %c0_i32 = arith.constant 0 : i32
    %c0_i32_0 = arith.constant 0 : i32
    %c0_i32_1 = arith.constant 0 : i32
    return %c0_i32, %c0_i32_0 : i32, i32
  }
  func.func @transform_6(%arg0: i32) -> (i32, i32) {
    %c0_i32 = arith.constant 0 : i32
    %c0_i32_0 = arith.constant 0 : i32
    %c0_i32_1 = arith.constant 0 : i32
    return %c0_i32, %c0_i32_0 : i32, i32
  }
  func.func @transform_7(%arg0: i32) -> (i32, i32, i32) {
    %c0_i32 = arith.constant 0 : i32
    %c0_i32_0 = arith.constant 0 : i32
    %c0_i32_1 = arith.constant 0 : i32
    return %arg0, %c0_i32, %c0_i32_0 : i32, i32, i32
  }
}

</mosaic_0001>

<llo_original>
// kernel: tpu_custom_call.1
$region0: #{tpu_custom_call.1}
  #allocation0 [shape = 'u32[]', space=smem, size = 0x4, offset = 0x4, fixed_abs, tag = 'smem constant byte address 0x4 - core index']
  #allocation1 [shape = 'u32[144,128]{1,0:T(1,128)}', space=vmem, size = 0x12000, scoped, tag = 'internal scratch']
  %s0 = inlined_call_operand.vmem [shape: s32[1,16,1], index: 0, kind: input, shape index: {}]
  %s1 = inlined_call_operand.vmem [shape: f32[1,16,128], index: 1, kind: input, shape index: {}]
  %s2 = inlined_call_operand.hbm [shape: f32[256,128], index: 2, kind: input, shape index: {}]
  %s3 = inlined_call_operand.hbm [shape: f32[2,128,128], index: 3, kind: input, shape index: {}]
  %s4 = inlined_call_operand.vmem [shape: f32[3,128], index: 4, kind: input, shape index: {}]
  %s5 = inlined_call_operand.vmem [shape: f32[3,128], index: 5, kind: input, shape index: {}]
  %s6 = inlined_call_operand.hbm [shape: f32[3,128], index: 6, kind: input, shape index: {}]
  %s7 = inlined_call_operand.hbm [shape: f32[1,16,128], index: 7, kind: output, shape index: {}]
  %s8 = sld [smem:[#allocation0]]
  $region50: #{tpu_custom_call.1} parent=0
    _
  %s10 = ssub.s32 1, %s8
  %s11 = scalar_select 0, %s10, %s8
  $region1: #{tpu_custom_call.1} parent=0
    #allocation2 [shape = 'u8[131072]{0}', space=vmem, size = 0x20000, scoped, tag = 'input window, operand 2, single buffered']
    #allocation3 [shape = 's32[1]{0}', space=sflag, size = 0x4, scoped, tag = 'scoped memory for tpu_custom_call.1']
    #allocation4 [shape = 's32[1]{0}', space=sflag, size = 0x4, scoped, tag = 'scoped memory for tpu_custom_call.1']
    #allocation5 [shape = 'u8[131072]{0}', space=vmem, size = 0x20000, scoped, tag = 'input window, operand 3, single buffered']
    #allocation6 [shape = 's32[1]{0}', space=sflag, size = 0x4, scoped, tag = 'scoped memory for tpu_custom_call.1']
    #allocation7 [shape = 'u8[2048]{0}', space=vmem, size = 0x800, scoped, tag = 'input window, operand 6, single buffered']
    #allocation8 [shape = 'u8[8192]{0}', space=vmem, size = 0x2000, scoped, tag = 'output window, operand 0, single buffered']
    %12 = vsyncpa [#allocation3], 0
    %13 = vsyncpa [#allocation6], 0
    %14 = vsyncpa [#allocation4], 0
    // Predicated region
    $region2: #{tpu_custom_call.1} parent=1 // pred_check
      _
    $region3: #{tpu_custom_call.1} parent=1 // pred_check_branch
      %16 = sbr.rel (0) target = $region5
    $region4: #{tpu_custom_call.1} parent=1 // pred_region
      _
    $region5: #{tpu_custom_call.1} parent=1 // pred_fallthru
      _
    // Predicated region
    $region6: #{tpu_custom_call.1} parent=1 // pred_check
      _
    $region7: #{tpu_custom_call.1} parent=1 // pred_check_branch
      %18 = sbr.rel (0) target = $region9
    $region8: #{tpu_custom_call.1} parent=1 // pred_region
      _
    $region9: #{tpu_custom_call.1} parent=1 // pred_fallthru
      _
    // Predicated region
    $region10: #{tpu_custom_call.1} parent=1 // pred_check
      _
    $region11: #{tpu_custom_call.1} parent=1 // pred_check_branch
      %20 = sbr.rel (0) target = $region13
    $region12: #{tpu_custom_call.1} parent=1 // pred_region
      %s22 = ssub.s32 4096, 4096
      %23 = vsyncadd [#allocation3], %s22
      %s24 = sshll.u32 [#allocation2], 4
      %s25 = int_to_ptr.vmem [resolvable:$true] %s24
      %30 = dma.hbm_to_vmem [thread:$0]  %s2, 4096, %s25, [#allocation3], 128, 128, 8
    $region13: #{tpu_custom_call.1} parent=1 // pred_fallthru
      _
    // Predicated region
    $region14: #{tpu_custom_call.1} parent=1 // pred_check
      _
    $region15: #{tpu_custom_call.1} parent=1 // pred_check_branch
      %32 = sbr.rel (0) target = $region17
    $region16: #{tpu_custom_call.1} parent=1 // pred_region
      %s34 = ssub.s32 4096, 4096
      %35 = vsyncadd [#allocation6], %s34
      %s36 = sshll.u32 [#allocation5], 4
      %s37 = int_to_ptr.vmem [resolvable:$true] %s36
      %42 = dma.hbm_to_vmem [thread:$0]  %s3, 4096, %s37, [#allocation6], 128, 128, 8
    $region17: #{tpu_custom_call.1} parent=1 // pred_fallthru
      _
    // Predicated region
    $region18: #{tpu_custom_call.1} parent=1 // pred_check
      _
    $region19: #{tpu_custom_call.1} parent=1 // pred_check_branch
      %44 = sbr.rel (0) target = $region21
    $region20: #{tpu_custom_call.1} parent=1 // pred_region
      _
    $region21: #{tpu_custom_call.1} parent=1 // pred_fallthru
      _
    // Predicated region
    $region22: #{tpu_custom_call.1} parent=1 // pred_check
      _
    $region23: #{tpu_custom_call.1} parent=1 // pred_check_branch
      %46 = sbr.rel (0) target = $region25
    $region24: #{tpu_custom_call.1} parent=1 // pred_region
      _
    $region25: #{tpu_custom_call.1} parent=1 // pred_fallthru
      _
    // Predicated region
    $region26: #{tpu_custom_call.1} parent=1 // pred_check
      _
    $region27: #{tpu_custom_call.1} parent=1 // pred_check_branch
      %48 = sbr.rel (0) target = $region29
    $region28: #{tpu_custom_call.1} parent=1 // pred_region
      %s50 = ssub.s32 64, 64
      %51 = vsyncadd [#allocation6], %s50
      %s53 = sshll.u32 [#allocation7], 4
      %s54 = int_to_ptr.vmem [resolvable:$true] %s53
      %56 = dma.hbm_to_vmem [thread:$0]  %s6, 64, %s54, [#allocation6]
    $region29: #{tpu_custom_call.1} parent=1 // pred_fallthru
      _
    // Predicated region
    $region30: #{tpu_custom_call.1} parent=1 // pred_check
      _
    $region31: #{tpu_custom_call.1} parent=1 // pred_check_branch
      %58 = sbr.rel (0) target = $region33
    $region32: #{tpu_custom_call.1} parent=1 // pred_region
      %59 = dma.done [#allocation3], 4096
    $region33: #{tpu_custom_call.1} parent=1 // pred_fallthru
      _
    // Predicated region
    $region34: #{tpu_custom_call.1} parent=1 // pred_check
      _
    $region35: #{tpu_custom_call.1} parent=1 // pred_check_branch
      %61 = sbr.rel (0) target = $region37
    $region36: #{tpu_custom_call.1} parent=1 // pred_region
      %62 = dma.done [#allocation6], 4096
    $region37: #{tpu_custom_call.1} parent=1 // pred_fallthru
      _
    // Predicated region
    $region38: #{tpu_custom_call.1} parent=1 // pred_check
      _
    $region39: #{tpu_custom_call.1} parent=1 // pred_check_branch
      %64 = sbr.rel (0) target = $region41
    $region40: #{tpu_custom_call.1} parent=1 // pred_region
      %65 = dma.done [#allocation6], 64
    $region41: #{tpu_custom_call.1} parent=1 // pred_fallthru
      _
    %v66 = vld [vmem:[%s1] sm:$0xff]
    %v67 = vld [vmem:[%s1 + $0x8] sm:$0xff]
    %v68 = vld [vmem:[%s0] sm:$0xff]
    %v69 = vld [vmem:[%s0 + $0x8] sm:$0xff]
    %v70 = vlaneseq
    %v71 = vand.u32 %v70, 127
    %72 = vset.pattern.permute.xlu0 0
    %73 = vperm.xlu0 %72, %v68
    %v74 = vpop.permute.xlu0 %73
    %75 = vset.pattern.permute.xlu0 0
    %76 = vperm.xlu0 %75, %v69
    %v77 = vpop.permute.xlu0 %76
    %vm78 = vcmp.eq.s32.totalorder %v74, %v71
    %vm79 = vcmp.eq.s32.totalorder %v77, %v71
    %v80 = vsel %vm78, 1, 0
    %v81 = vsel %vm79, 1, 0
    %v82 = vcvt.s32.f32 %v80
    %v83 = vcvt.s32.f32 %v81
    %v84 = vld [vmem:[#allocation2] sm:$0xff]
    %v85 = vld [vmem:[#allocation2 + $0x8] sm:$0xff]
    %v86 = vld [vmem:[#allocation2 + $0x10] sm:$0xff]
    %v87 = vld [vmem:[#allocation2 + $0x18] sm:$0xff]
    %v88 = vld [vmem:[#allocation2 + $0x20] sm:$0xff]
    %v89 = vld [vmem:[#allocation2 + $0x28] sm:$0xff]
    %v90 = vld [vmem:[#allocation2 + $0x30] sm:$0xff]
    %v91 = vld [vmem:[#allocation2 + $0x38] sm:$0xff]
    %v92 = vld [vmem:[#allocation2 + $0x40] sm:$0xff]
    %v93 = vld [vmem:[#allocation2 + $0x48] sm:$0xff]
    %v94 = vld [vmem:[#allocation2 + $0x50] sm:$0xff]
    %v95 = vld [vmem:[#allocation2 + $0x58] sm:$0xff]
    %v96 = vld [vmem:[#allocation2 + $0x60] sm:$0xff]
    %v97 = vld [vmem:[#allocation2 + $0x68] sm:$0xff]
    %v98 = vld [vmem:[#allocation2 + $0x70] sm:$0xff]
    %v99 = vld [vmem:[#allocation2 + $0x78] sm:$0xff]
    %v100 = vld [vmem:[#allocation2 + $0x80] sm:$0xff]
    %v101 = vld [vmem:[#allocation2 + $0x88] sm:$0xff]
    %v102 = vld [vmem:[#allocation2 + $0x90] sm:$0xff]
    %v103 = vld [vmem:[#allocation2 + $0x98] sm:$0xff]
    %v104 = vld [vmem:[#allocation2 + $0xa0] sm:$0xff]
    %v105 = vld [vmem:[#allocation2 + $0xa8] sm:$0xff]
    %v106 = vld [vmem:[#allocation2 + $0xb0] sm:$0xff]
    %v107 = vld [vmem:[#allocation2 + $0xb8] sm:$0xff]
    %v108 = vld [vmem:[#allocation2 + $0xc0] sm:$0xff]
    %v109 = vld [vmem:[#allocation2 + $0xc8] sm:$0xff]
    %v110 = vld [vmem:[#allocation2 + $0xd0] sm:$0xff]
    %v111 = vld [vmem:[#allocation2 + $0xd8] sm:$0xff]
    %v112 = vld [vmem:[#allocation2 + $0xe0] sm:$0xff]
    %v113 = vld [vmem:[#allocation2 + $0xe8] sm:$0xff]
    %v114 = vld [vmem:[#allocation2 + $0xf0] sm:$0xff]
    %v115 = vld [vmem:[#allocation2 + $0xf8] sm:$0xff]
    %v116 = vld [vmem:[%s4] sm:$0x1]
    %v117 = vlaneseq
    %v118 = vshrl.u32 %v117, 7
    %v119 = vsub.s32 0, %v118
    %v120 = vrot.slane %v116, %v119
    %121 = vmatprep.subr.mxu0 0.0
    %122 = vmatpush1.msra.mxu0 %v99
    %123 = vmatprep.subr.mxu0 0.0
    %124 = vmatpush1.msra.mxu0 %v98
    %125 = vmatprep.subr.mxu0 0.0
    %126 = vmatpush1.msra.mxu0 %v97
    %127 = vmatprep.subr.mxu0 0.0
    %128 = vmatpush1.msra.mxu0 %v96
    %129 = vmatprep.subr.mxu0 0.0
    %130 = vmatpush1.msra.mxu0 %v95
    %131 = vmatprep.subr.mxu0 0.0
    %132 = vmatpush1.msra.mxu0 %v94
    %133 = vmatprep.subr.mxu0 0.0
    %134 = vmatpush1.msra.mxu0 %v93
    %135 = vmatprep.subr.mxu0 0.0
    %136 = vmatpush1.msra.mxu0 %v92
    %137 = vmatprep.subr.mxu0 0.0
    %138 = vmatpush1.msra.mxu0 %v91
    %139 = vmatprep.subr.mxu0 0.0
    %140 = vmatpush1.msra.mxu0 %v90
    %141 = vmatprep.subr.mxu0 0.0
    %142 = vmatpush1.msra.mxu0 %v89
    %143 = vmatprep.subr.mxu0 0.0
    %144 = vmatpush1.msra.mxu0 %v88
    %145 = vmatprep.subr.mxu0 0.0
    %146 = vmatpush1.msra.mxu0 %v87
    %147 = vmatprep.subr.mxu0 0.0
    %148 = vmatpush1.msra.mxu0 %v86
    %149 = vmatprep.subr.mxu0 0.0
    %150 = vmatpush1.msra.mxu0 %v85
    %151 = vmatprep.subr.mxu0 0.0
    %152 = vmatpush1.msra.mxu0 %v84
    %153 = vmatprep.subr.mxu0 0.0
    %154 = vmatpush2.msra.mxu0 %v115
    %155 = vmatprep.subr.mxu0 0.0
    %156 = vmatpush2.msra.mxu0 %v114
    %157 = vmatprep.subr.mxu0 0.0
    %158 = vmatpush2.msra.mxu0 %v113
    %159 = vmatprep.subr.mxu0 0.0
    %160 = vmatpush2.msra.mxu0 %v112
    %161 = vmatprep.subr.mxu0 0.0
    %162 = vmatpush2.msra.mxu0 %v111
    %163 = vmatprep.subr.mxu0 0.0
    %164 = vmatpush2.msra.mxu0 %v110
    %165 = vmatprep.subr.mxu0 0.0
    %166 = vmatpush2.msra.mxu0 %v109
    %167 = vmatprep.subr.mxu0 0.0
    %168 = vmatpush2.msra.mxu0 %v108
    %169 = vmatprep.subr.mxu0 0.0
    %170 = vmatpush2.msra.mxu0 %v107
    %171 = vmatprep.subr.mxu0 0.0
    %172 = vmatpush2.msra.mxu0 %v106
    %173 = vmatprep.subr.mxu0 0.0
    %174 = vmatpush2.msra.mxu0 %v105
    %175 = vmatprep.subr.mxu0 0.0
    %176 = vmatpush2.msra.mxu0 %v104
    %177 = vmatprep.subr.mxu0 0.0
    %178 = vmatpush2.msra.mxu0 %v103
    %179 = vmatprep.subr.mxu0 0.0
    %180 = vmatpush2.msra.mxu0 %v102
    %181 = vmatprep.subr.mxu0 0.0
    %182 = vmatpush2.msra.mxu0 %v101
    %183 = vmatprep.subr.mxu0 0.0
    %184 = vmatpush2.msra.mxu0 %v100
    %185 = vmatprep.mubr.f32.mxu0 %v82
    %186 = vmatmul.mubr.f32.gmra.mxu0 %v66
    %v187 = vpop.f32.mrf.mxu0
    %v188 = vadd.f32 %v120, %v187
    %v189 = vpop.f32.mrf.mxu0
    %190 = vmatprep.mubr.f32.mxu0 %v83
    %191 = vmatmul.mubr.f32.gmra.mxu0 %v67
    %v192 = vpop.f32.mrf.mxu0
    %v193 = vadd.f32 %v120, %v192
    %v194 = vpop.f32.mrf.mxu0
    %195 = vdwg.mxu0
    %v196 = vmax.f32 %v188, 0.0
    %v197 = vmax.f32 %v193, 0.0
    %v198 = vld [vmem:[%s5] sm:$0x1]
    %v199 = vld [vmem:[#allocation7] sm:$0x1]
    %v200 = vadd.f32 %v196, %v197
    %v201 = vrot.slane %v200, 4
    %v202 = vadd.f32 %v200, %v201
    %v203 = vrot.slane %v202, 2
    %v204 = vadd.f32 %v202, %v203
    %v205 = vrot.slane %v204, 1
    %v206 = vadd.f32 %v204, %v205
    %v207 = vmul.f32 %v206, 0.0625
    %v208 = vsub.f32 %v196, %v207
    %v209 = vsub.f32 %v197, %v207
    %v210 = vmul.f32 %v208, %v208
    %v211 = vmul.f32 %v209, %v209
    %v212 = vadd.f32 %v210, %v211
    %v213 = vrot.slane %v212, 4
    %v214 = vadd.f32 %v212, %v213
    %v215 = vrot.slane %v214, 2
    %v216 = vadd.f32 %v214, %v215
    %v217 = vrot.slane %v216, 1
    %v218 = vadd.f32 %v216, %v217
    %v219 = vmul.f32 %v218, 0.0625
    %v220 = vadd.f32 %v219, 1e-05
    %v221 = vrsqrt.pop %v220
    %v222 = vmul.f32 %v221, %v198
    %v223 = vlaneseq
    %v224 = vshrl.u32 %v223, 7
    %v225 = vsub.s32 0, %v224
    %v226 = vrot.slane %v222, %v225
    %v227 = vmul.f32 %v208, %v226
    %v228 = vmul.f32 %v209, %v226
    %v229 = vlaneseq
    %v230 = vshrl.u32 %v229, 7
    %v231 = vsub.s32 0, %v230
    %v232 = vrot.slane %v199, %v231
    %v233 = vadd.f32 %v227, %v232
    %v234 = vadd.f32 %v228, %v232
    %v235 = vld [vmem:[#allocation5] sm:$0xff]
    %v236 = vld [vmem:[#allocation5 + $0x8] sm:$0xff]
    %v237 = vld [vmem:[#allocation5 + $0x10] sm:$0xff]
    %v238 = vld [vmem:[#allocation5 + $0x18] sm:$0xff]
    %v239 = vld [vmem:[#allocation5 + $0x20] sm:$0xff]
    %v240 = vld [vmem:[#allocation5 + $0x28] sm:$0xff]
    %v241 = vld [vmem:[#allocation5 + $0x30] sm:$0xff]
    %v242 = vld [vmem:[#allocation5 + $0x38] sm:$0xff]
    %v243 = vld [vmem:[#allocation5 + $0x40] sm:$0xff]
    %v244 = vld [vmem:[#allocation5 + $0x48] sm:$0xff]
    %v245 = vld [vmem:[#allocation5 + $0x50] sm:$0xff]
    %v246 = vld [vmem:[#allocation5 + $0x58] sm:$0xff]
    %v247 = vld [vmem:[#allocation5 + $0x60] sm:$0xff]
    %v248 = vld [vmem:[#allocation5 + $0x68] sm:$0xff]
    %v249 = vld [vmem:[#allocation5 + $0x70] sm:$0xff]
    %v250 = vld [vmem:[#allocation5 + $0x78] sm:$0xff]
    %v251 = vld [vmem:[%s4 + $0x1] sm:$0x1]
    %v252 = vlaneseq
    %v253 = vshrl.u32 %v252, 7
    %v254 = vsub.s32 0, %v253
    %v255 = vrot.slane %v251, %v254
    %256 = vmatprep.subr.mxu0 0.0
    %257 = vmatpush1.msra.mxu0 %v250
    %258 = vmatprep.subr.mxu0 0.0
    %259 = vmatpush1.msra.mxu0 %v249
    %260 = vmatprep.subr.mxu0 0.0
    %261 = vmatpush1.msra.mxu0 %v248
    %262 = vmatprep.subr.mxu0 0.0
    %263 = vmatpush1.msra.mxu0 %v247
    %264 = vmatprep.subr.mxu0 0.0
    %265 = vmatpush1.msra.mxu0 %v246
    %266 = vmatprep.subr.mxu0 0.0
    %267 = vmatpush1.msra.mxu0 %v245
    %268 = vmatprep.subr.mxu0 0.0
    %269 = vmatpush1.msra.mxu0 %v244
    %270 = vmatprep.subr.mxu0 0.0
    %271 = vmatpush1.msra.mxu0 %v243
    %272 = vmatprep.subr.mxu0 0.0
    %273 = vmatpush1.msra.mxu0 %v242
    %274 = vmatprep.subr.mxu0 0.0
    %275 = vmatpush1.msra.mxu0 %v241
    %276 = vmatprep.subr.mxu0 0.0
    %277 = vmatpush1.msra.mxu0 %v240
    %278 = vmatprep.subr.mxu0 0.0
    %279 = vmatpush1.msra.mxu0 %v239
    %280 = vmatprep.subr.mxu0 0.0
    %281 = vmatpush1.msra.mxu0 %v238
    %282 = vmatprep.subr.mxu0 0.0
    %283 = vmatpush1.msra.mxu0 %v237
    %284 = vmatprep.subr.mxu0 0.0
    %285 = vmatpush1.msra.mxu0 %v236
    %286 = vmatprep.subr.mxu0 0.0
    %287 = vmatpush1.msra.mxu0 %v235
    %288 = vmatprep.subr.mxu0 0.0
    %289 = vmatpush2.msra.mxu0 0.0
    %290 = vmatprep.subr.mxu0 0.0
    %291 = vmatpush2.msra.mxu0 0.0
    %292 = vmatprep.subr.mxu0 0.0
    %293 = vmatpush2.msra.mxu0 0.0
    %294 = vmatprep.subr.mxu0 0.0
    %295 = vmatpush2.msra.mxu0 0.0
    %296 = vmatprep.subr.mxu0 0.0
    %297 = vmatpush2.msra.mxu0 0.0
    %298 = vmatprep.subr.mxu0 0.0
    %299 = vmatpush2.msra.mxu0 0.0
    %300 = vmatprep.subr.mxu0 0.0
    %301 = vmatpush2.msra.mxu0 0.0
    %302 = vmatprep.subr.mxu0 0.0
    %303 = vmatpush2.msra.mxu0 0.0
    %304 = vmatprep.subr.mxu0 0.0
    %305 = vmatpush2.msra.mxu0 0.0
    %306 = vmatprep.subr.mxu0 0.0
    %307 = vmatpush2.msra.mxu0 0.0
    %308 = vmatprep.subr.mxu0 0.0
    %309 = vmatpush2.msra.mxu0 0.0
    %310 = vmatprep.subr.mxu0 0.0
    %311 = vmatpush2.msra.mxu0 0.0
    %312 = vmatprep.subr.mxu0 0.0
    %313 = vmatpush2.msra.mxu0 0.0
    %314 = vmatprep.subr.mxu0 0.0
    %315 = vmatpush2.msra.mxu0 0.0
    %316 = vmatprep.subr.mxu0 0.0
    %317 = vmatpush2.msra.mxu0 0.0
    %318 = vmatprep.subr.mxu0 0.0
    %319 = vmatpush2.msra.mxu0 0.0
    %320 = vmatprep.mubr.f32.mxu0 0.0
    %321 = vmatmul.mubr.f32.gmra.mxu0 %v233
    %v322 = vpop.f32.mrf.mxu0
    %v323 = vadd.f32 %v255, %v322
    %v324 = vpop.f32.mrf.mxu0
    %325 = vmatprep.mubr.f32.mxu0 0.0
    %326 = vmatmul.mubr.f32.gmra.mxu0 %v234
    %v327 = vpop.f32.mrf.mxu0
    %v328 = vadd.f32 %v255, %v327
    %v329 = vpop.f32.mrf.mxu0
    %330 = vdwg.mxu0
    %v331 = vmax.f32 %v323, 0.0
    %v332 = vmax.f32 %v328, 0.0
    %v333 = vld [vmem:[%s5 + $0x1] sm:$0x1]
    %v334 = vld [vmem:[#allocation7 + $0x1] sm:$0x1]
    %v335 = vadd.f32 %v331, %v332
    %v336 = vrot.slane %v335, 4
    %v337 = vadd.f32 %v335, %v336
    %v338 = vrot.slane %v337, 2
    %v339 = vadd.f32 %v337, %v338
    %v340 = vrot.slane %v339, 1
    %v341 = vadd.f32 %v339, %v340
    %v342 = vmul.f32 %v341, 0.0625
    %v343 = vsub.f32 %v331, %v342
    %v344 = vsub.f32 %v332, %v342
    %v345 = vmul.f32 %v343, %v343
    %v346 = vmul.f32 %v344, %v344
    %v347 = vadd.f32 %v345, %v346
    %v348 = vrot.slane %v347, 4
    %v349 = vadd.f32 %v347, %v348
    %v350 = vrot.slane %v349, 2
    %v351 = vadd.f32 %v349, %v350
    %v352 = vrot.slane %v351, 1
    %v353 = vadd.f32 %v351, %v352
    %v354 = vmul.f32 %v353, 0.0625
    %v355 = vadd.f32 %v354, 1e-05
    %v356 = vrsqrt.pop %v355
    %v357 = vmul.f32 %v356, %v333
    %v358 = vlaneseq
    %v359 = vshrl.u32 %v358, 7
    %v360 = vsub.s32 0, %v359
    %v361 = vrot.slane %v357, %v360
    %v362 = vmul.f32 %v343, %v361
    %v363 = vmul.f32 %v344, %v361
    %v364 = vlaneseq
    %v365 = vshrl.u32 %v364, 7
    %v366 = vsub.s32 0, %v365
    %v367 = vrot.slane %v334, %v366
    %v368 = vadd.f32 %v362, %v367
    %v369 = vadd.f32 %v363, %v367
    %s370 = scalar_lea.vmem [#allocation5], 128
    %v371 = vld [vmem:[%s370] sm:$0xff]
    %v372 = vld [vmem:[%s370 + $0x8] sm:$0xff]
    %v373 = vld [vmem:[%s370 + $0x10] sm:$0xff]
    %v374 = vld [vmem:[%s370 + $0x18] sm:$0xff]
    %v375 = vld [vmem:[%s370 + $0x20] sm:$0xff]
    %v376 = vld [vmem:[%s370 + $0x28] sm:$0xff]
    %v377 = vld [vmem:[%s370 + $0x30] sm:$0xff]
    %v378 = vld [vmem:[%s370 + $0x38] sm:$0xff]
    %v379 = vld [vmem:[%s370 + $0x40] sm:$0xff]
    %v380 = vld [vmem:[%s370 + $0x48] sm:$0xff]
    %v381 = vld [vmem:[%s370 + $0x50] sm:$0xff]
    %v382 = vld [vmem:[%s370 + $0x58] sm:$0xff]
    %v383 = vld [vmem:[%s370 + $0x60] sm:$0xff]
    %v384 = vld [vmem:[%s370 + $0x68] sm:$0xff]
    %v385 = vld [vmem:[%s370 + $0x70] sm:$0xff]
    %v386 = vld [vmem:[%s370 + $0x78] sm:$0xff]
    %v387 = vld [vmem:[%s4 + $0x2] sm:$0x1]
    %v388 = vlaneseq
    %v389 = vshrl.u32 %v388, 7
    %v390 = vsub.s32 0, %v389
    %v391 = vrot.slane %v387, %v390
    %392 = vmatprep.subr.mxu0 0.0
    %393 = vmatpush1.msra.mxu0 %v386
    %394 = vmatprep.subr.mxu0 0.0
    %395 = vmatpush1.msra.mxu0 %v385
    %396 = vmatprep.subr.mxu0 0.0
    %397 = vmatpush1.msra.mxu0 %v384
    %398 = vmatprep.subr.mxu0 0.0
    %399 = vmatpush1.msra.mxu0 %v383
    %400 = vmatprep.subr.mxu0 0.0
    %401 = vmatpush1.msra.mxu0 %v382
    %402 = vmatprep.subr.mxu0 0.0
    %403 = vmatpush1.msra.mxu0 %v381
    %404 = vmatprep.subr.mxu0 0.0
    %405 = vmatpush1.msra.mxu0 %v380
    %406 = vmatprep.subr.mxu0 0.0
    %407 = vmatpush1.msra.mxu0 %v379
    %408 = vmatprep.subr.mxu0 0.0
    %409 = vmatpush1.msra.mxu0 %v378
    %410 = vmatprep.subr.mxu0 0.0
    %411 = vmatpush1.msra.mxu0 %v377
    %412 = vmatprep.subr.mxu0 0.0
    %413 = vmatpush1.msra.mxu0 %v376
    %414 = vmatprep.subr.mxu0 0.0
    %415 = vmatpush1.msra.mxu0 %v375
    %416 = vmatprep.subr.mxu0 0.0
    %417 = vmatpush1.msra.mxu0 %v374
    %418 = vmatprep.subr.mxu0 0.0
    %419 = vmatpush1.msra.mxu0 %v373
    %420 = vmatprep.subr.mxu0 0.0
    %421 = vmatpush1.msra.mxu0 %v372
    %422 = vmatprep.subr.mxu0 0.0
    %423 = vmatpush1.msra.mxu0 %v371
    %424 = vmatprep.subr.mxu0 0.0
    %425 = vmatpush2.msra.mxu0 0.0
    %426 = vmatprep.subr.mxu0 0.0
    %427 = vmatpush2.msra.mxu0 0.0
    %428 = vmatprep.subr.mxu0 0.0
    %429 = vmatpush2.msra.mxu0 0.0
    %430 = vmatprep.subr.mxu0 0.0
    %431 = vmatpush2.msra.mxu0 0.0
    %432 = vmatprep.subr.mxu0 0.0
    %433 = vmatpush2.msra.mxu0 0.0
    %434 = vmatprep.subr.mxu0 0.0
    %435 = vmatpush2.msra.mxu0 0.0
    %436 = vmatprep.subr.mxu0 0.0
    %437 = vmatpush2.msra.mxu0 0.0
    %438 = vmatprep.subr.mxu0 0.0
    %439 = vmatpush2.msra.mxu0 0.0
    %440 = vmatprep.subr.mxu0 0.0
    %441 = vmatpush2.msra.mxu0 0.0
    %442 = vmatprep.subr.mxu0 0.0
    %443 = vmatpush2.msra.mxu0 0.0
    %444 = vmatprep.subr.mxu0 0.0
    %445 = vmatpush2.msra.mxu0 0.0
    %446 = vmatprep.subr.mxu0 0.0
    %447 = vmatpush2.msra.mxu0 0.0
    %448 = vmatprep.subr.mxu0 0.0
    %449 = vmatpush2.msra.mxu0 0.0
    %450 = vmatprep.subr.mxu0 0.0
    %451 = vmatpush2.msra.mxu0 0.0
    %452 = vmatprep.subr.mxu0 0.0
    %453 = vmatpush2.msra.mxu0 0.0
    %454 = vmatprep.subr.mxu0 0.0
    %455 = vmatpush2.msra.mxu0 0.0
    %456 = vmatprep.mubr.f32.mxu0 0.0
    %457 = vmatmul.mubr.f32.gmra.mxu0 %v368
    %v458 = vpop.f32.mrf.mxu0
    %v459 = vadd.f32 %v391, %v458
    %v460 = vpop.f32.mrf.mxu0
    %461 = vmatprep.mubr.f32.mxu0 0.0
    %462 = vmatmul.mubr.f32.gmra.mxu0 %v369
    %v463 = vpop.f32.mrf.mxu0
    %v464 = vadd.f32 %v391, %v463
    %v465 = vpop.f32.mrf.mxu0
    %466 = vdwg.mxu0
    %v467 = vmax.f32 %v459, 0.0
    %v468 = vmax.f32 %v464, 0.0
    %v469 = vld [vmem:[%s5 + $0x2] sm:$0x1]
    %v470 = vld [vmem:[#allocation7 + $0x2] sm:$0x1]
    %v471 = vadd.f32 %v467, %v468
    %v472 = vrot.slane %v471, 4
    %v473 = vadd.f32 %v471, %v472
    %v474 = vrot.slane %v473, 2
    %v475 = vadd.f32 %v473, %v474
    %v476 = vrot.slane %v475, 1
    %v477 = vadd.f32 %v475, %v476
    %v478 = vmul.f32 %v477, 0.0625
    %v479 = vsub.f32 %v467, %v478
    %v480 = vsub.f32 %v468, %v478
    %v481 = vmul.f32 %v479, %v479
    %v482 = vmul.f32 %v480, %v480
    %v483 = vadd.f32 %v481, %v482
    %v484 = vrot.slane %v483, 4
    %v485 = vadd.f32 %v483, %v484
    %v486 = vrot.slane %v485, 2
    %v487 = vadd.f32 %v485, %v486
    %v488 = vrot.slane %v487, 1
    %v489 = vadd.f32 %v487, %v488
    %v490 = vmul.f32 %v489, 0.0625
    %v491 = vadd.f32 %v490, 1e-05
    %v492 = vrsqrt.pop %v491
    %v493 = vmul.f32 %v492, %v469
    %v494 = vlaneseq
    %v495 = vshrl.u32 %v494, 7
    %v496 = vsub.s32 0, %v495
    %v497 = vrot.slane %v493, %v496
    %v498 = vmul.f32 %v479, %v497
    %v499 = vmul.f32 %v480, %v497
    %v500 = vlaneseq
    %v501 = vshrl.u32 %v500, 7
    %v502 = vsub.s32 0, %v501
    %v503 = vrot.slane %v470, %v502
    %v504 = vadd.f32 %v498, %v503
    %v505 = vadd.f32 %v499, %v503
    %506 = vst [vmem:[#allocation8] sm:$0xff] %v504
    %507 = vst [vmem:[#allocation8 + $0x8] sm:$0xff] %v505
    // Predicated region
    $region42: #{tpu_custom_call.1} parent=1 // pred_check
      _
    $region43: #{tpu_custom_call.1} parent=1 // pred_check_branch
      %509 = sbr.rel (0) target = $region45
    $region44: #{tpu_custom_call.1} parent=1 // pred_region
      %s511 = ssub.s32 256, 256
      %512 = vsyncadd [#allocation4], %s511
      %s513 = sshll.u32 [#allocation8], 4
      %s514 = int_to_ptr.vmem [resolvable:$true] %s513
      %519 = dma.vmem_to_hbm [thread:$0]  %s514, 256, %s7, [#allocation4], 128, 128, 8
    $region45: #{tpu_custom_call.1} parent=1 // pred_fallthru
      _
    // Predicated region
    $region46: #{tpu_custom_call.1} parent=1 // pred_check
      _
    $region47: #{tpu_custom_call.1} parent=1 // pred_check_branch
      %521 = sbr.rel (0) target = $region49
    $region48: #{tpu_custom_call.1} parent=1 // pred_region
      %522 = dma.done [#allocation4], 256
    $region49: #{tpu_custom_call.1} parent=1 // pred_fallthru
      _
    %523 = vsyncpa [#allocation3], 1
    %524 = vsyncpa [#allocation6], 1
    %525 = vsyncpa [#allocation4], 1

</llo_original>
